<compile_context>
chip_gen: v5e
topology: v5e:2x2
jax: 0.10.0
libtpu: 0.0.40
codegen_flags: <defaults>
</compile_context>

<pallas_src>
import functools
import math

import jax
import jax.numpy as jnp
from jax.experimental import pallas as pl
from jax.experimental.pallas import tpu as pltpu


# ----------------------------- config ---------------------------------------
class Cfg:
    vocab_size = 256
    dim = 256
    n_layers = 2
    n_heads = 4
    n_kv_heads = 2
    head_dim = 64            # dim // n_heads
    hidden_dim = 512
    max_batch_size = 2
    max_seq_len = 16
    rope_theta = 10000.0
    norm_eps = 1e-5


CFG = Cfg()


# ----------------------------- tiling helpers --------------------------------
def _row_tile(m, target=256):
    """Largest row tile that divides m, is a multiple of 8, and is <= target."""
    if m % 8 != 0:
        return m                     # block equal to the (small) full dim is legal
    t = min(target, m)
    t -= t % 8
    while m % t != 0:
        t -= 8
    return t


def _col_tile(n, target=256):
    """Largest lane tile that divides n, is a multiple of 128, and is <= target."""
    if n % 128 != 0:
        return n
    t = min(target, n)
    t -= t % 128
    while n % t != 0:
        t -= 128
    return t


# ----------------------------- Pallas kernels --------------------------------
def _rmsnorm_matmul_kernel(x_ref, g_ref, w_ref, o_ref, *, eps):
    """o[i, j-tile] = RMSNorm(x; g) @ w[:, j-tile].

    Norm math in f32 (v5e-friendly), MXU inputs bf16, f32 accumulation.
    The RMSNorm is recomputed per N tile (cheap VPU work) so both grid axes
    stay fully parallel (megacore friendly).
    """
    x = x_ref[...]                                     # (tm, D) f32
    var = jnp.mean(x * x, axis=-1, keepdims=True)
    xn = (x * jax.lax.rsqrt(var + eps)) * g_ref[...]
    o_ref[...] = jnp.dot(xn.astype(jnp.bfloat16), w_ref[...],
                         preferred_element_type=jnp.float32)


def rmsnorm_matmul(x, gamma, w_t, eps, *, tm_target=256, tn_target=256):
    """x: (M, D) f32, gamma: (D,) f32, w_t: (D, N) bf16 -> (M, N) f32."""
    M, D = x.shape
    N = w_t.shape[1]
    tm = _row_tile(M, tm_target)
    tn = _col_tile(N, tn_target)
    # TODO(synk): for very large D, add a K-reduction grid axis (with precomputed
    # per-row inverse-RMS) instead of keeping the full-D contraction in one block.
    return pl.pallas_call(
        functools.partial(_rmsnorm_matmul_kernel, eps=eps),
        out_shape=jax.ShapeDtypeStruct((M, N), jnp.float32),
        grid=(M // tm, N // tn),
        in_specs=[pl.BlockSpec((tm, D), lambda i, j: (i, 0)),
                  pl.BlockSpec((1, D), lambda i, j: (0, 0)),
                  pl.BlockSpec((D, tn), lambda i, j: (0, j))],
        out_specs=pl.BlockSpec((tm, tn), lambda i, j: (i, j)),
        compiler_params=pltpu.CompilerParams(
            dimension_semantics=("parallel", "parallel")),
    )(x, gamma.reshape(1, D), w_t)


def _attention_kernel(start_ref, q_ref, k_ref, v_ref, res_ref, wo_ref, o_ref, *,
                      scale, seqlen, n_rep):
    """Fused attention for one (batch, kv-head) grid point.

    q_ref:   (1, 1, R, Dh) bf16 with R = n_rep*S (query heads sharing this KV
             head are row-batched -> one QK^T / PV matmul per KV head).
    k/v_ref: (1, 1, Tmax, Dh) bf16 full cache block; the causal mask hides the
             unwritten tail so no live-prefix slicing / copying is needed.
    res_ref/o_ref: (1, S, D) f32.  wo_ref: (1, n_rep*Dh, D) bf16.
    Output block is revisited across the kv-head grid axis and accumulates
    residual + sum_h ctx_h @ Wo_h.
    """
    g = pl.program_id(1)
    start = start_ref[0]                               # SMEM scalar (dynamic)
    R, Dh = q_ref.shape[2], q_ref.shape[3]
    T = k_ref.shape[2]
    S = seqlen

    q = q_ref[0, 0]                                    # (R, Dh) bf16
    k = k_ref[0, 0]                                    # (T, Dh) bf16
    v = v_ref[0, 0]                                    # (T, Dh) bf16

    s = jax.lax.dot_general(q, k, (((1,), (1,)), ((), ())),
                            preferred_element_type=jnp.float32)       # (R, T)

    # Causal additive bias built in-kernel; also masks the unwritten cache tail.
    row = jax.lax.broadcasted_iota(jnp.int32, (R, T), 0)
    col = jax.lax.broadcasted_iota(jnp.int32, (R, T), 1)
    q_pos = (row % S) + start
    s = s * scale + jnp.where(col <= q_pos, 0.0, -1e30)

    m = jnp.max(s, axis=-1, keepdims=True)
    p = jnp.exp(s - m)                                 # un-normalized probs
    l = jnp.sum(p, axis=-1, keepdims=True)
    ctx = jnp.dot(p.astype(jnp.bfloat16), v,
                  preferred_element_type=jnp.float32)                  # (R, Dh)
    # Normalize the (R, Dh) context instead of the (R, T) probabilities.
    ctx = ctx * pl.reciprocal(l, approx=True)

    # Rows ordered (rep, s) -> columns ordered by query head: (S, n_rep*Dh),
    # then a single concat-heads o_proj matmul per KV group (contraction n_rep*Dh).
    ctx_cat = jnp.concatenate([ctx[r * S:(r + 1) * S] for r in range(n_rep)],
                              axis=-1).astype(jnp.bfloat16)
    contrib = jnp.dot(ctx_cat, wo_ref[0], preferred_element_type=jnp.float32)

    @pl.when(g == 0)
    def _():
        o_ref[0] = res_ref[0] + contrib

    @pl.when(g > 0)
    def _():
        o_ref[0] = o_ref[0] + contrib


def pallas_attention(start_arr, q, keys, values, residual, wo_g, scale, n_rep):
    """q: (B,Hkv,n_rep*S,Dh) bf16, keys/values: (B,Hkv,Tmax,Dh) bf16,
    residual: (B,S,D) f32, wo_g: (Hkv, n_rep*Dh, D) bf16."""
    B, Hkv, R, Dh = q.shape
    T = keys.shape[2]
    S, D = residual.shape[1], residual.shape[2]
    # TODO(synk): for long contexts, tile the KV axis (grid axis "arbitrary")
    # with online-softmax m/l/acc scratch instead of one full-cache block.
    grid_spec = pltpu.PrefetchScalarGridSpec(
        num_scalar_prefetch=1,                 # start_pos in SMEM -> no recompiles
        grid=(B, Hkv),
        in_specs=[
            pl.BlockSpec((1, 1, R, Dh), lambda b, g, sp: (b, g, 0, 0)),
            pl.BlockSpec((1, 1, T, Dh), lambda b, g, sp: (b, g, 0, 0)),
            pl.BlockSpec((1, 1, T, Dh), lambda b, g, sp: (b, g, 0, 0)),
            pl.BlockSpec((1, S, D), lambda b, g, sp: (b, 0, 0)),
            pl.BlockSpec((1, wo_g.shape[1], D), lambda b, g, sp: (g, 0, 0)),
        ],
        out_specs=pl.BlockSpec((1, S, D), lambda b, g, sp: (b, 0, 0)),
    )
    return pl.pallas_call(
        functools.partial(_attention_kernel, scale=scale, seqlen=S, n_rep=n_rep),
        out_shape=jax.ShapeDtypeStruct((B, S, D), jnp.float32),
        grid_spec=grid_spec,
        compiler_params=pltpu.CompilerParams(
            dimension_semantics=("parallel", "arbitrary")),
    )(start_arr, q, keys, values, residual, wo_g)


def _norm_ffn_kernel(h_ref, g_ref, w1_ref, w3_ref, w2_ref, o_ref,
                     xn_ref, acc_ref, *, eps):
    """o = h + SwiGLU(RMSNorm(h; g)); hidden dim tiled with an f32 accumulator."""
    j = pl.program_id(1)

    @pl.when(j == 0)
    def _():
        h = h_ref[...]                                  # (tm, D) f32
        var = jnp.mean(h * h, axis=-1, keepdims=True)
        xn_ref[...] = ((h * jax.lax.rsqrt(var + eps)) * g_ref[...]).astype(jnp.bfloat16)
        acc_ref[...] = jnp.zeros_like(acc_ref)

    xn = xn_ref[...]                                    # (tm, D) bf16, cached
    gate = jnp.dot(xn, w1_ref[...], preferred_element_type=jnp.float32)
    up = jnp.dot(xn, w3_ref[...], preferred_element_type=jnp.float32)
    act = (gate * jax.nn.sigmoid(gate)) * up            # SiLU * up, f32
    acc_ref[...] += jnp.dot(act.astype(jnp.bfloat16), w2_ref[...],
                            preferred_element_type=jnp.float32)

    @pl.when(j == pl.num_programs(1) - 1)
    def _():
        o_ref[...] = h_ref[...] + acc_ref[...]


def pallas_norm_ffn_residual(h, gamma, w1_t, w3_t, w2_t, eps, *,
                             tm_target=256, th_target=256):
    """h: (M, D) f32; w1_t/w3_t: (D, H) bf16; w2_t: (H, D) bf16 -> (M, D) f32."""
    M, D = h.shape
    H = w1_t.shape[1]
    tm = _row_tile(M, tm_target)
    th = _col_tile(H, th_target)
    return pl.pallas_call(
        functools.partial(_norm_ffn_kernel, eps=eps),
        out_shape=jax.ShapeDtypeStruct((M, D), jnp.float32),
        grid=(M // tm, H // th),
        in_specs=[pl.BlockSpec((tm, D), lambda i, j: (i, 0)),
                  pl.BlockSpec((1, D), lambda i, j: (0, 0)),
                  pl.BlockSpec((D, th), lambda i, j: (0, j)),
                  pl.BlockSpec((D, th), lambda i, j: (0, j)),
                  pl.BlockSpec((th, D), lambda i, j: (j, 0))],
        out_specs=pl.BlockSpec((tm, D), lambda i, j: (i, 0)),
        scratch_shapes=[pltpu.VMEM((tm, D), jnp.bfloat16),   # cached RMSNorm(h)
                        pltpu.VMEM((tm, D), jnp.float32)],   # FFN accumulator
        compiler_params=pltpu.CompilerParams(
            dimension_semantics=("parallel", "arbitrary")),
    )(h, gamma.reshape(1, D), w1_t, w3_t, w2_t)


# ----------------------------- glue (plain JAX) -------------------------------
def precompute_freqs_cis(head_dim, end, theta):
    freqs = 1.0 / (theta ** (jnp.arange(0, head_dim, 2, dtype=jnp.float32) / head_dim))
    t = jnp.arange(end, dtype=jnp.float32)
    freqs = jnp.outer(t, freqs)                # (end, head_dim // 2)
    return jnp.cos(freqs), jnp.sin(freqs)


def _deinterleave_perm(n_heads, head_dim):
    """Within each head: [even feature indices, odd feature indices]."""
    idx = []
    for h in range(n_heads):
        base = h * head_dim
        idx.extend(range(base, base + head_dim, 2))
        idx.extend(range(base + 1, base + head_dim, 2))
    return jnp.array(idx, dtype=jnp.int32)


def apply_rope_half(x, cos, sin):
    """Rotate-half RoPE on (B, S, H, Dh) whose per-head columns are already
    de-interleaved (evens | odds) via the weight permutation at init.
    Mathematically identical to torch's interleaved complex RoPE.
    TODO(synk): fuse into the QKV kernel (emit q/k in an all-evens|all-odds slab
    so a single pltpu.roll implements rotate-half) to skip this HBM round trip."""
    half = x.shape[-1] // 2
    x1, x2 = x[..., :half], x[..., half:]
    c = cos[None, :, None, :]
    s = sin[None, :, None, :]
    return jnp.concatenate([x1 * c - x2 * s, x2 * c + x1 * s], axis=-1)


def attention_block(p, x, cache_k, cache_v, start_pos, start_arr, cos, sin, cfg):
    """x is the raw block input; RMSNorm is fused into the QKV kernel and the
    residual add + o_proj into the attention kernel."""
    B, S, D = x.shape
    Hq, Hkv, Dh = cfg.n_heads, cfg.n_kv_heads, cfg.head_dim
    n_rep = Hq // Hkv
    nq, nkv = Hq * Dh, Hkv * Dh

    # Fused RMSNorm + concatenated QKV projection (N-tiled, lane-dense output).
    qkv = rmsnorm_matmul(x.reshape(B * S, D), p["ln1"], p["wqkv_t"], cfg.norm_eps)
    # Split offsets (nq, nq+nkv) are multiples of 128 -> lane-aligned slices.
    xq = qkv[:, :nq].reshape(B, S, Hq, Dh)
    xk = qkv[:, nq:nq + nkv].reshape(B, S, Hkv, Dh)
    xv = qkv[:, nq + nkv:].reshape(B, S, Hkv, Dh)

    xq = apply_rope_half(xq, cos, sin)
    xk = apply_rope_half(xk, cos, sin)

    # GQA row-batching: (B, Hkv, n_rep*S, Dh) so each KV head sees one matmul.
    q = xq.transpose(0, 2, 1, 3).reshape(B, Hkv, n_rep * S, Dh).astype(jnp.bfloat16)
    k_new = xk.transpose(0, 2, 1, 3).astype(jnp.bfloat16)      # (B, Hkv, S, Dh)
    v_new = xv.transpose(0, 2, 1, 3).astype(jnp.bfloat16)

    # bf16 head-major KV cache; only the new S tokens are written.
    # TODO(synk): alias the caches through input_output_aliases (or write them
    # from a small Pallas kernel) so the update never copies the whole cache.
    cache_k = jax.lax.dynamic_update_slice(cache_k, k_new, (0, 0, start_pos, 0))
    cache_v = jax.lax.dynamic_update_slice(cache_v, v_new, (0, 0, start_pos, 0))

    out = pallas_attention(start_arr, q, cache_k[:B], cache_v[:B], x, p["wo_g"],
                           1.0 / math.sqrt(Dh), n_rep)
    return out, cache_k, cache_v


def transformer_block(p, x, cache_k, cache_v, start_pos, start_arr, cos, sin, cfg):
    B, S, D = x.shape
    h, cache_k, cache_v = attention_block(p, x, cache_k, cache_v,
                                          start_pos, start_arr, cos, sin, cfg)
    out = pallas_norm_ffn_residual(h.reshape(B * S, D), p["ln2"],
                                   p["w1_t"], p["w3_t"], p["w2_t"],
                                   cfg.norm_eps).reshape(B, S, D)
    return out, cache_k, cache_v


def transformer_forward(params, tokens, start_pos, caches, cfg):
    B, S = tokens.shape
    assert start_pos + S <= cfg.max_seq_len
    D, V = cfg.dim, cfg.vocab_size

    h = params["embed"][tokens]                        # (B, S, D) embedding gather
    cos = params["cos"][start_pos:start_pos + S]
    sin = params["sin"][start_pos:start_pos + S]
    start_arr = jnp.array([start_pos], dtype=jnp.int32)   # SMEM scalar prefetch

    new_caches = []
    for layer_p, (ck, cv) in zip(params["layers"], caches):
        h, ck, cv = transformer_block(layer_p, h, ck, cv, start_pos, start_arr,
                                      cos, sin, cfg)
        new_caches.append((ck, cv))

    logits = rmsnorm_matmul(h.reshape(B * S, D), params["norm"],
                            params["lm_head_t"], cfg.norm_eps)
    return logits.reshape(B, S, V).astype(jnp.float32), new_caches


# ----------------------------- params ----------------------------------------
def init_params(key, cfg):
    """Returns (kernel params, raw params).  `raw` keeps the original-orientation
    weights (rounded through bf16 exactly like the kernel copies) so the pure-JAX
    reference below shares the same quantization."""
    bf = jnp.bfloat16

    def normal(k, shape, scale=0.02):
        return scale * jax.random.normal(k, shape, dtype=jnp.float32)

    def q16(w):
        return w.astype(bf).astype(jnp.float32)

    Hq, Hkv, Dh, D, Hd = cfg.n_heads, cfg.n_kv_heads, cfg.head_dim, cfg.dim, cfg.hidden_dim
    n_rep = Hq // Hkv
    keys = jax.random.split(key, 4 + cfg.n_layers)

    embed = normal(keys[0], (cfg.vocab_size, D))
    norm_g = 1.0 + 0.1 * jax.random.normal(keys[1], (D,), dtype=jnp.float32)
    lm_head = q16(normal(keys[2], (cfg.vocab_size, D)))
    cos, sin = precompute_freqs_cis(Dh, cfg.max_seq_len * 2, cfg.rope_theta)

    perm_q = _deinterleave_perm(Hq, Dh)
    perm_k = _deinterleave_perm(Hkv, Dh)

    params = {"embed": embed, "norm": norm_g,
              "lm_head_t": lm_head.T.astype(bf), "cos": cos, "sin": sin}
    raw = {"embed": embed, "norm": norm_g, "lm_head": lm_head, "cos": cos, "sin": sin}

    p_layers, r_layers = [], []
    for li in range(cfg.n_layers):
        lk = jax.random.split(keys[4 + li], 9)
        wq = q16(normal(lk[0], (Hq * Dh, D)))
        wk = q16(normal(lk[1], (Hkv * Dh, D)))
        wv = q16(normal(lk[2], (Hkv * Dh, D)))
        wo = q16(normal(lk[3], (D, Hq * Dh)))
        w1 = q16(normal(lk[4], (Hd, D)))     # gate proj
        w3 = q16(normal(lk[5], (Hd, D)))     # up proj
        w2 = q16(normal(lk[6], (D, Hd)))     # down proj
        ln1 = 1.0 + 0.1 * jax.random.normal(lk[7], (D,), dtype=jnp.float32)
        ln2 = 1.0 + 0.1 * jax.random.normal(lk[8], (D,), dtype=jnp.float32)
        p_layers.append({
            "ln1": ln1, "ln2": ln2,
            # Fused QKV weight [Q(deinterleaved) | K(deinterleaved) | V],
            # pre-transposed once to (D, N) and stored bf16 for the MXU.
            "wqkv_t": jnp.concatenate([wq[perm_q], wk[perm_k], wv], axis=0).T.astype(bf),
            # o_proj grouped per KV head: (Hkv, n_rep*Dh, D) bf16 so each grid
            # point does one concat-heads matmul with contraction n_rep*Dh.
            "wo_g": wo.T.reshape(Hkv, n_rep * Dh, D).astype(bf),
            "w1_t": w1.T.astype(bf), "w3_t": w3.T.astype(bf), "w2_t": w2.T.astype(bf),
        })
        r_layers.append({"ln1": ln1, "ln2": ln2, "wq": wq, "wk": wk, "wv": wv,
                         "wo": wo, "w1": w1, "w3": w3, "w2": w2})
    params["layers"] = p_layers
    raw["layers"] = r_layers
    return params, raw


def init_caches(cfg):
    # bf16, head-major (B, Hkv, T, Dh): half the DMA bytes, no per-layer transpose.
    shape = (cfg.max_batch_size, cfg.n_kv_heads, cfg.max_seq_len, cfg.head_dim)
    return [(jnp.zeros(shape, jnp.bfloat16), jnp.zeros(shape, jnp.bfloat16))
            for _ in range(cfg.n_layers)]


# ------------------- pure-JAX reference (PyTorch semantics) -------------------
def _rmsnorm_ref(x, g, eps):
    var = jnp.mean(x * x, axis=-1, keepdims=True)
    return x * jax.lax.rsqrt(var + eps) * g


def _rope_interleaved_ref(x, cos, sin):
    xr, xi = x[..., 0::2], x[..., 1::2]
    c = cos[None, :, None, :]
    s = sin[None, :, None, :]
    out_r = xr * c - xi * s
    out_i = xr * s + xi * c
    return jnp.stack([out_r, out_i], axis=-1).reshape(x.shape)


def init_ref_caches(cfg):
    shape = (cfg.max_batch_size, cfg.max_seq_len, cfg.n_kv_heads, cfg.head_dim)
    return [(jnp.zeros(shape, jnp.float32), jnp.zeros(shape, jnp.float32))
            for _ in range(cfg.n_layers)]


def reference_forward(raw, tokens, start_pos, caches, cfg):
    B, S = tokens.shape
    Hq, Hkv, Dh = cfg.n_heads, cfg.n_kv_heads, cfg.head_dim
    n_rep = Hq // Hkv
    scale = 1.0 / math.sqrt(Dh)
    T = start_pos + S

    h = raw["embed"][tokens]
    cos = raw["cos"][start_pos:start_pos + S]
    sin = raw["sin"][start_pos:start_pos + S]
    q_pos = start_pos + jnp.arange(S)[:, None]
    k_pos = jnp.arange(T)[None, :]
    causal = k_pos <= q_pos

    new_caches = []
    for lp, (ck, cv) in zip(raw["layers"], caches):
        xn = _rmsnorm_ref(h, lp["ln1"], cfg.norm_eps)
        q = (xn @ lp["wq"].T).reshape(B, S, Hq, Dh)
        k = (xn @ lp["wk"].T).reshape(B, S, Hkv, Dh)
        v = (xn @ lp["wv"].T).reshape(B, S, Hkv, Dh)
        q = _rope_interleaved_ref(q, cos, sin)
        k = _rope_interleaved_ref(k, cos, sin)
        ck = jax.lax.dynamic_update_slice(ck, k, (0, start_pos, 0, 0))
        cv = jax.lax.dynamic_update_slice(cv, v, (0, start_pos, 0, 0))
        keys = jnp.repeat(ck[:B, :T], n_rep, axis=2).transpose(0, 2, 1, 3)
        vals = jnp.repeat(cv[:B, :T], n_rep, axis=2).transpose(0, 2, 1, 3)
        qt = q.transpose(0, 2, 1, 3)
        scores = jnp.einsum("bhsd,bhtd->bhst", qt, keys) * scale
        scores = jnp.where(causal[None, None], scores, -1e30)
        p = jax.nn.softmax(scores, axis=-1)
        ctx = jnp.einsum("bhst,bhtd->bhsd", p, vals)
        attn = ctx.transpose(0, 2, 1, 3).reshape(B, S, Hq * Dh) @ lp["wo"].T
        h = h + attn
        xn2 = _rmsnorm_ref(h, lp["ln2"], cfg.norm_eps)
        gate = xn2 @ lp["w1"].T
        up = xn2 @ lp["w3"].T
        h = h + ((gate * jax.nn.sigmoid(gate)) * up) @ lp["w2"].T
        new_caches.append((ck, cv))

    hn = _rmsnorm_ref(h, raw["norm"], cfg.norm_eps)
    logits = hn @ raw["lm_head"].T
    return logits.astype(jnp.float32), new_caches


# ----------------------------- main -------------------------------------------
if __name__ == "__main__":
    key = jax.random.PRNGKey(0)
    pkey, tkey = jax.random.split(key)
    params, raw = init_params(pkey, CFG)
    caches = init_caches(CFG)
    ref_caches = init_ref_caches(CFG)

    B, S = CFG.max_batch_size, 8
    tokens = jax.random.randint(tkey, (B, S), 0, CFG.vocab_size, dtype=jnp.int32)

    # ---- prefill (start_pos = 0) ----
    logits, caches = transformer_forward(params, tokens, 0, caches, CFG)
    logits = jax.block_until_ready(logits)
    ref_logits, ref_caches = reference_forward(raw, tokens, 0, ref_caches, CFG)

    assert logits.shape == (B, S, CFG.vocab_size)
    assert logits.dtype == jnp.float32
    assert bool(jnp.all(jnp.isfinite(logits)))
    err = float(jnp.max(jnp.abs(logits - ref_logits)))
    assert err < 5e-2, f"prefill mismatch vs reference: {err}"

    # ---- one decode step (start_pos = S) exercising the bf16 KV cache ----
    next_tok = jnp.argmax(logits[:, -1, :], axis=-1).astype(jnp.int32)[:, None]
    logits2, caches = transformer_forward(params, next_tok, S, caches, CFG)
    logits2 = jax.block_until_ready(logits2)
    ref_logits2, ref_caches = reference_forward(raw, next_tok, S, ref_caches, CFG)

    assert logits2.shape == (B, 1, CFG.vocab_size)
    assert bool(jnp.all(jnp.isfinite(logits2)))
    err2 = float(jnp.max(jnp.abs(logits2 - ref_logits2)))
    assert err2 < 5e-2, f"decode mismatch vs reference: {err2}"

    print("KERNEL_OK")
</pallas_src>

<mosaic_0001>
module attributes {stable_mosaic.version = 11 : i64} {
  func.func @_rmsnorm_matmul_kernel(%arg0: i32, %arg1: i32, %arg2: memref<16x256xf32, #tpu.memory_space<vmem>>, %arg3: memref<1x256xf32, #tpu.memory_space<vmem>>, %arg4: memref<256x256xbf16, #tpu.memory_space<vmem>>, %arg5: memref<16x256xf32, #tpu.memory_space<vmem>>) attributes {dimension_semantics = [#tpu.dimension_semantics<parallel>, #tpu.dimension_semantics<parallel>], iteration_bounds = array<i64: 1, 2>, scalar_prefetch = 0 : i64, scratch_operands = 0 : i64, tpu.core_type = #tpu.core_type<tc>, window_params = [{transform_indices = @transform_0, window_bounds = array<i64: 16, 256>}, {pipeline_mode = #tpu.pipeline_mode<synchronous>, transform_indices = @transform_1, window_bounds = array<i64: 1, 256>}, {transform_indices = @transform_2, window_bounds = array<i64: 256, 256>}, {transform_indices = @transform_3, window_bounds = array<i64: 16, 256>}]} {
    %c0 = arith.constant 0 : index
    %c0_0 = arith.constant 0 : index
    %0 = vector.load %arg2[%c0, %c0_0] : memref<16x256xf32, #tpu.memory_space<vmem>>, vector<16x256xf32>
    %1 = arith.mulf %0, %0 : vector<16x256xf32>
    %cst = arith.constant dense<0.000000e+00> : vector<16xf32>
    %2 = vector.multi_reduction <add>, %1, %cst [1] : vector<16x256xf32> to vector<16xf32>
    %3 = vector.shape_cast %2 : vector<16xf32> to vector<16x1xf32>
    %cst_1 = arith.constant 2.560000e+02 : f32
    %4 = vector.broadcast %cst_1 : f32 to vector<16x1xf32>
    %5 = arith.divf %3, %4 : vector<16x1xf32>
    %cst_2 = arith.constant 9.99999974E-6 : f32
    %6 = vector.broadcast %cst_2 : f32 to vector<16x1xf32>
    %7 = arith.addf %5, %6 : vector<16x1xf32>
    %8 = math.rsqrt %7 : vector<16x1xf32>
    %9 = vector.broadcast %8 : vector<16x1xf32> to vector<16x256xf32>
    %10 = arith.mulf %0, %9 : vector<16x256xf32>
    %c0_3 = arith.constant 0 : index
    %c0_4 = arith.constant 0 : index
    %11 = vector.load %arg3[%c0_3, %c0_4] : memref<1x256xf32, #tpu.memory_space<vmem>>, vector<1x256xf32>
    %12 = vector.broadcast %11 : vector<1x256xf32> to vector<16x256xf32>
    %13 = arith.mulf %10, %12 : vector<16x256xf32>
    %14 = arith.truncf %13 : vector<16x256xf32> to vector<16x256xbf16>
    %c0_5 = arith.constant 0 : index
    %c0_6 = arith.constant 0 : index
    %15 = vector.load %arg4[%c0_5, %c0_6] : memref<256x256xbf16, #tpu.memory_space<vmem>>, vector<256x256xbf16>
    %cst_7 = arith.constant dense<0.000000e+00> : vector<16x256xf32>
    %16 = tpu.matmul %14, %15, %cst_7 {dimension_numbers = #tpu.dot_dimension_numbers<[1], [0], [0], [1], [0, 0, 1, 1], [], []>} : vector<16x256xbf16>, vector<256x256xbf16>, vector<16x256xf32> -> vector<16x256xf32>
    %c0_8 = arith.constant 0 : index
    %c0_9 = arith.constant 0 : index
    %17 = vector.load %arg5[%c0_8, %c0_9] : memref<16x256xf32, #tpu.memory_space<vmem>>, vector<16x256xf32>
    tpu.vector_store %arg5[%c0_8, %c0_9], %16 {strides = array<i32>} : memref<16x256xf32, #tpu.memory_space<vmem>>, vector<16x256xf32>,
    return
  }
  func.func @transform_0(%arg0: i32, %arg1: i32) -> (i32, i32) {
    %c0_i32 = arith.constant 0 : i32
    %c0_i32_0 = arith.constant 0 : i32
    return %arg0, %c0_i32 : i32, i32
  }
  func.func @transform_1(%arg0: i32, %arg1: i32) -> (i32, i32) {
    %c0_i32 = arith.constant 0 : i32
    %c0_i32_0 = arith.constant 0 : i32
    %c0_i32_1 = arith.constant 0 : i32
    return %c0_i32, %c0_i32_0 : i32, i32
  }
  func.func @transform_2(%arg0: i32, %arg1: i32) -> (i32, i32) {
    %c0_i32 = arith.constant 0 : i32
    %c0_i32_0 = arith.constant 0 : i32
    return %c0_i32, %arg1 : i32, i32
  }
  func.func @transform_3(%arg0: i32, %arg1: i32) -> (i32, i32) {
    %c0_i32 = arith.constant 0 : i32
    return %arg0, %arg1 : i32, i32
  }
}

</mosaic_0001>

<llo_original>
// kernel: tpu_custom_call.1
$region0: #{tpu_custom_call.1}
  #allocation0 [shape = 'u32[]', space=smem, size = 0x4, offset = 0x4, fixed_abs, tag = 'smem constant byte address 0x4 - core index']
  #allocation1 [shape = 'u32[72,128]{1,0:T(1,128)}', space=vmem, size = 0x9000, scoped, tag = 'internal scratch']
  %s0 = inlined_call_operand.hbm [shape: f32[16,256], index: 0, kind: input, shape index: {}]
  %s1 = inlined_call_operand.hbm [shape: f32[1,256], index: 1, kind: input, shape index: {}]
  %s2 = inlined_call_operand.hbm [shape: bf16[256,512], index: 2, kind: input, shape index: {}]
  %s3 = inlined_call_operand.hbm [shape: f32[16,512], index: 3, kind: output, shape index: {}]
  %s4 = sld [smem:[#allocation0]]
  $region57: #{tpu_custom_call.1} parent=0
    _
  %s6 = ssub.s32 1, %s4
  %s7 = scalar_select 0, %s6, %s4
  $region1: #{tpu_custom_call.1} parent=0
    #allocation2 [shape = 'u8[16384]{0}', space=vmem, size = 0x4000, scoped, tag = 'input window, operand 0, single buffered']
    #allocation3 [shape = 's32[2]{0}', space=sflag, size = 0x8, scoped, tag = 'scoped memory for tpu_custom_call.1']
    #allocation4 [shape = 's32[2]{0}', space=sflag, size = 0x8, scoped, tag = 'scoped memory for tpu_custom_call.1']
    #allocation5 [shape = 'u8[1024]{0}', space=vmem, size = 0x400, scoped, tag = 'input window, operand 1, single buffered']
    #allocation6 [shape = 's32[1]{0}', space=sflag, size = 0x4, scoped, tag = 'scoped memory for tpu_custom_call.1']
    #allocation7 [shape = 'u8[262144]{0}', space=vmem, size = 0x40000, scoped, tag = 'input window, operand 2']
    #allocation8 [shape = 'u8[32768]{0}', space=vmem, size = 0x8000, scoped, tag = 'output window, operand 0']
    %8 = vsyncpa [#allocation3], 0
    %9 = vsyncpa [#allocation6], 0
    %10 = vsyncpa [#allocation4], 0
    %s11 = scalar_lea.sflag [#allocation4], 1
    %12 = vsyncpa %s11, 0
    loop: start=0, step=1, limit=4
    $region2: #{tpu_custom_call.1} parent=1 // loop_pre_header
      _
    $region3: #{tpu_custom_call.1} parent=1 // loop_header
      %s14 = sphi 0, %s18
      %p15 = scmp.ge.s32.totalorder %s14, 4
      %s21 = sphi 0, %s33
      %s22 = sphi 0, %s29
      %s23 = sphi 0, %s21
      %s24 = sphi 0, %s22
      %s25 = sphi 0, %s23
      %s26 = sphi 0, %s24
      %s36 = sphi 0, %s38
      %s39 = sphi 0, %s36
      %s40 = sphi 0, %s39
      %s56 = sphi 0, %s40
      %s60 = sphi 0, %s60
      %s62 = sphi 0, %s60
      %s63 = sphi 0, %s62
      %s77 = sphi 0, %s63
      %s83 = sphi 0, %s85
      %s86 = sphi 0, %s83
      %s87 = sphi 0, %s86
      %s103 = sphi 0, %s87
      %s111 = sphi 0, %s113
      %s114 = sphi 0, %s111
      %s115 = sphi 0, %s114
      %s131 = sphi 0, %s115
    $region4: #{tpu_custom_call.1} parent=1 // loop_header_branch
      %17 = sbr.rel (%p15) target = $region8
    $region5: #{tpu_custom_call.1} parent=1 // loop_body
      %s19 = ssub.s32 %s14, 1
      %s20 = ssub.s32 %s14, 2
      %s27 = sadd.s32 1, %s22
      %p28 = scmp.ge.s32.totalorder %s27, 2
      %s29 = scalar_select %p28, 0, %s27
      %s30 = sadd.s32 1, %s21
      %s31 = scalar_select %p28, %s30, %s21
      %p32 = scmp.ge.s32.totalorder %s31, 1
      %s33 = scalar_select %p32, 0, %s31
      %s34 = ssub.s32 %s21, %s33
      %p35 = scmp.eq.s32.totalorder %s34, 0
      %s37 = sadd.s32 %s36, 1
      %s38 = scalar_select %p35, %s36, %s37
      %p41 = pneg %p35
      %p42 = scmp.eq.s32.totalorder %s14, 1
      %p43 = por %p41, %p42
      %p44 = scmp.ne.s32.totalorder %s36, %s39
      %p45 = scmp.eq.s32.totalorder %s14, 0
      %p46 = por %p44, %p45
      %p47 = scmp.ne.s32.totalorder %s36, %s39
      %p48 = scmp.eq.s32.totalorder %s19, 1
      %p49 = por %p47, %p48
      %p50 = scmp.ne.s32.totalorder %s39, %s40
      %p51 = scmp.eq.s32.totalorder %s19, 0
      %p52 = por %p50, %p51
      %p53 = scmp.ne.s32.totalorder %s39, %s40
      %p54 = scmp.eq.s32.totalorder %s20, 1
      %p55 = por %p53, %p54
      %p57 = scmp.ne.s32.totalorder %s40, %s56
      %p58 = scmp.eq.s32.totalorder %s20, 0
      %p59 = por %p57, %p58
      %s61 = sadd.s32 %s60, 1
      %p64 = scmp.eq.s32.totalorder %s14, 1
      %p65 = scmp.ne.s32.totalorder %s60, %s62
      %p66 = scmp.eq.s32.totalorder %s14, 0
      %p67 = por %p65, %p66
      %p68 = scmp.ne.s32.totalorder %s60, %s62
      %p69 = scmp.eq.s32.totalorder %s19, 1
      %p70 = por %p68, %p69
      %p71 = scmp.ne.s32.totalorder %s62, %s63
      %p72 = scmp.eq.s32.totalorder %s19, 0
      %p73 = por %p71, %p72
      %p74 = scmp.ne.s32.totalorder %s62, %s63
      %p75 = scmp.eq.s32.totalorder %s20, 1
      %p76 = por %p74, %p75
      %p78 = scmp.ne.s32.totalorder %s63, %s77
      %p79 = scmp.eq.s32.totalorder %s20, 0
      %p80 = por %p78, %p79
      %s81 = ssub.s32 %s22, %s29
      %p82 = scmp.eq.s32.totalorder %s81, 0
      %s84 = sadd.s32 %s83, 1
      %s85 = scalar_select %p82, %s83, %s84
      %p88 = pneg %p82
      %p89 = scmp.eq.s32.totalorder %s14, 1
      %p90 = por %p88, %p89
      %p91 = scmp.ne.s32.totalorder %s83, %s86
      %p92 = scmp.eq.s32.totalorder %s14, 0
      %p93 = por %p91, %p92
      %p94 = scmp.ne.s32.totalorder %s83, %s86
      %p95 = scmp.eq.s32.totalorder %s19, 1
      %p96 = por %p94, %p95
      %p97 = scmp.ne.s32.totalorder %s86, %s87
      %p98 = scmp.eq.s32.totalorder %s19, 0
      %p99 = por %p97, %p98
      %p100 = scmp.ne.s32.totalorder %s86, %s87
      %p101 = scmp.eq.s32.totalorder %s20, 1
      %p102 = por %p100, %p101
      %p104 = scmp.ne.s32.totalorder %s87, %s103
      %p105 = scmp.eq.s32.totalorder %s20, 0
      %p106 = por %p104, %p105
      %s107 = ssub.s32 %s21, %s33
      %s108 = ssub.s32 %s22, %s29
      %s109 = sor.u32 %s107, %s108
      %p110 = scmp.eq.s32.totalorder %s109, 0
      %s112 = sadd.s32 %s111, 1
      %s113 = scalar_select %p110, %s111, %s112
      %p116 = pneg %p110
      %p117 = scmp.eq.s32.totalorder %s14, 1
      %p118 = por %p116, %p117
      %p119 = scmp.ne.s32.totalorder %s111, %s114
      %p120 = scmp.eq.s32.totalorder %s14, 0
      %p121 = por %p119, %p120
      %p122 = scmp.ne.s32.totalorder %s111, %s114
      %p123 = scmp.eq.s32.totalorder %s19, 1
      %p124 = por %p122, %p123
      %p125 = scmp.ne.s32.totalorder %s114, %s115
      %p126 = scmp.eq.s32.totalorder %s19, 0
      %p127 = por %p125, %p126
      %p128 = scmp.ne.s32.totalorder %s114, %s115
      %p129 = scmp.eq.s32.totalorder %s20, 1
      %p130 = por %p128, %p129
      %p132 = scmp.ne.s32.totalorder %s115, %s131
      %p133 = scmp.eq.s32.totalorder %s20, 0
      %p134 = por %p132, %p133
      %p135 = scmp.le.s32.totalorder 1, %s14
      %p136 = scmp.lt.s32.totalorder %s14, 3
      %p137 = pnand %p135, %p136
      %p138 = pneg %p137
      // Predicated region
      $region9: #{tpu_custom_call.1} parent=5 // pred_check
        _
      $region10: #{tpu_custom_call.1} parent=5 // pred_check_branch
        %140 = sbr.rel (%p137) target = $region12
      $region11: #{tpu_custom_call.1} parent=5 // pred_region
        %s141 = ssub.s32 %s14, 1
        // Predicated region
        $region13: #{tpu_custom_call.1} parent=11 // pred_check
          %p142 = pneg %p52
        $region14: #{tpu_custom_call.1} parent=11 // pred_check_branch
          %144 = sbr.rel (%p142) target = $region16
        $region15: #{tpu_custom_call.1} parent=11 // pred_region
          %s145 = smul.u32 2, %s23
          %147 = vsyncadd [#allocation3], 0
          %s148 = smul.addr %s145, 2
          %s149 = smul.addr %s148, 8
          %s150 = scalar_lea.hbm %s0, %s149
          %s151 = sshll.u32 %s150, 4
          %s152 = int_to_ptr.hbm [resolvable:$true] %s151
          %s153 = sshll.u32 [#allocation2], 4
          %s154 = int_to_ptr.vmem [resolvable:$true] %s153
          %159 = dma.hbm_to_vmem [thread:$0]  %s152, 512, %s154, [#allocation3], 256, 256, 16
        $region16: #{tpu_custom_call.1} parent=11 // pred_fallthru
          _
        // Predicated region
        $region17: #{tpu_custom_call.1} parent=11 // pred_check
          %p160 = pneg %p73
        $region18: #{tpu_custom_call.1} parent=11 // pred_check_branch
          %162 = sbr.rel (%p160) target = $region20
        $region19: #{tpu_custom_call.1} parent=11 // pred_region
          %164 = vsyncadd [#allocation6], 0
          %s166 = sshll.u32 %s1, 4
          %s167 = int_to_ptr.hbm [resolvable:$true] %s166
          %s168 = sshll.u32 [#allocation5], 4
          %s169 = int_to_ptr.vmem [resolvable:$true] %s168
          %171 = dma.hbm_to_vmem [thread:$0]  %s167, 32, %s169, [#allocation6]
        $region20: #{tpu_custom_call.1} parent=11 // pred_fallthru
          _
      $region12: #{tpu_custom_call.1} parent=5 // pred_fallthru
        _
      %p172 = scmp.lt.s32.totalorder %s14, 2
      // Predicated region
      $region21: #{tpu_custom_call.1} parent=5 // pred_check
        %p173 = pneg %p172
      $region22: #{tpu_custom_call.1} parent=5 // pred_check_branch
        %175 = sbr.rel (%p173) target = $region24
      $region23: #{tpu_custom_call.1} parent=5 // pred_region
        // Predicated region
        $region25: #{tpu_custom_call.1} parent=23 // pred_check
          %p176 = pneg %p93
        $region26: #{tpu_custom_call.1} parent=23 // pred_check_branch
          %178 = sbr.rel (%p176) target = $region28
        $region27: #{tpu_custom_call.1} parent=23 // pred_region
          %s179 = sand.u32 %s14, 1
          %s180 = scalar_lea.sflag [#allocation3], %s179
          %s181 = sand.u32 %s83, 1
          %s182 = smul.addr %s181, 256
          %s183 = scalar_lea.vmem [#allocation7], %s182
          %s184 = smul.u32 2, %s22
          %186 = vsyncadd %s180, 0
          %s187 = smul.addr %s184, 4
          %s188 = scalar_lea.hbm %s2, %s187
          %s189 = sshll.u32 %s188, 4
          %s190 = int_to_ptr.hbm [resolvable:$true] %s189
          %s191 = sshll.u32 %s183, 4
          %s192 = int_to_ptr.vmem [resolvable:$true] %s191
          %197 = dma.hbm_to_vmem [thread:$0]  %s190, 4096, %s192, %s180, 256, 128, 8
        $region28: #{tpu_custom_call.1} parent=23 // pred_fallthru
          _
      $region24: #{tpu_custom_call.1} parent=5 // pred_fallthru
        _
      %p198 = scmp.le.s32.totalorder 1, %s14
      %p199 = scmp.lt.s32.totalorder %s14, 3
      %p200 = pnand %p198, %p199
      %p201 = pneg %p200
      // Predicated region
      $region29: #{tpu_custom_call.1} parent=5 // pred_check
        _
      $region30: #{tpu_custom_call.1} parent=5 // pred_check_branch
        %203 = sbr.rel (%p200) target = $region32
      $region31: #{tpu_custom_call.1} parent=5 // pred_region
        %s204 = ssub.s32 %s14, 1
        // Predicated region
        $region33: #{tpu_custom_call.1} parent=31 // pred_check
          %p205 = pneg %p52
        $region34: #{tpu_custom_call.1} parent=31 // pred_check_branch
          %207 = sbr.rel (%p205) target = $region36
        $region35: #{tpu_custom_call.1} parent=31 // pred_region
          %209 = dma.done [#allocation3], 512
        $region36: #{tpu_custom_call.1} parent=31 // pred_fallthru
          _
        // Predicated region
        $region37: #{tpu_custom_call.1} parent=31 // pred_check
          %p210 = pneg %p73
        $region38: #{tpu_custom_call.1} parent=31 // pred_check_branch
          %212 = sbr.rel (%p210) target = $region40
        $region39: #{tpu_custom_call.1} parent=31 // pred_region
          %214 = dma.done [#allocation6], 32
        $region40: #{tpu_custom_call.1} parent=31 // pred_fallthru
          _
        %s215 = sand.u32 %s19, 1
        %s216 = scalar_lea.sflag [#allocation3], %s215
        %s217 = sand.u32 %s86, 1
        %s218 = smul.addr %s217, 256
        %s219 = scalar_lea.vmem [#allocation7], %s218
        // Predicated region
        $region41: #{tpu_custom_call.1} parent=31 // pred_check
          %p220 = pneg %p99
        $region42: #{tpu_custom_call.1} parent=31 // pred_check_branch
          %222 = sbr.rel (%p220) target = $region44
        $region43: #{tpu_custom_call.1} parent=31 // pred_region
          %224 = dma.done %s216, 4096
        $region44: #{tpu_custom_call.1} parent=31 // pred_fallthru
          _
        %p225 = pneg %p52
        %p226 = pneg %p49
        %p227 = pneg %p73
        %p228 = pneg %p70
        %s229 = sand.u32 %s19, 1
        %s230 = scalar_lea.sflag [#allocation3], %s229
        %s231 = sand.u32 %s86, 1
        %s232 = smul.addr %s231, 256
        %s233 = scalar_lea.vmem [#allocation7], %s232
        %p234 = pneg %p99
        %p235 = pneg %p96
        %p236 = pneg %p127
        %p237 = pneg %p124
        %s238 = sand.u32 %s114, 1
        %s239 = scalar_lea.sflag [#allocation4], %s238
        %s240 = sand.u32 %s114, 1
        %s241 = smul.addr %s240, 32
        %s242 = scalar_lea.vmem [#allocation8], %s241
        %s243 = smul.u32 2, %s23
        %s244 = smul.u32 2, %s24
        %s245 = smul.u32 2, %s23
        %s246 = smul.u32 2, %s24
        %v247 = vld [vmem:[#allocation2] sm:$0xff]
        %v248 = vld [vmem:[#allocation2 + $0x8] sm:$0xff]
        %v249 = vld [vmem:[#allocation2 + $0x10] sm:$0xff]
        %v250 = vld [vmem:[#allocation2 + $0x18] sm:$0xff]
        %v251 = vmul.f32 %v247, %v247
        %v252 = vmul.f32 %v248, %v248
        %v253 = vmul.f32 %v249, %v249
        %v254 = vmul.f32 %v250, %v250
        %v255 = vadd.f32 %v251, %v252
        %256 = vadd.xlane.f32.xlu0 %v255
        %v257 = vpop.xlane.xlu0 %256
        %v258 = vadd.f32 %v253, %v254
        %259 = vadd.xlane.f32.xlu0 %v258
        %v260 = vpop.xlane.xlu0 %259
        %v261 = vrcp.pop 256.0
        %v262 = vmul.f32 256.0, %v261
        %v263 = vsub.f32 1.0, %v262
        %v264 = vmul.f32 %v261, %v263
        %v265 = vadd.f32 %v261, %v264
        %vm266 = vweird.f32 %v261
        %v267 = vsel %vm266, %v261, %v265
        %v268 = vmul.f32 %v257, %v267
        %v269 = vmul.f32 %v260, %v267
        %v270 = vadd.f32 %v268, 1e-05
        %v271 = vadd.f32 %v269, 1e-05
        %v272 = vrsqrt.pop %v270
        %v273 = vmul.f32 %v272, %v270
        %v274 = vmul.f32 %v273, %v272
        %v275 = vmul.f32 0.5, %v274
        %v276 = vsub.f32 1.5, %v275
        %v277 = vmul.f32 %v272, %v276
        %vm278 = vweird.f32 %v270
        %vm279 = vweird.f32 %v272
        %vm280 = vmor %vm278, %vm279
        %v281 = vsel %vm280, %v272, %v277
        %v282 = vrsqrt.pop %v271
        %v283 = vmul.f32 %v282, %v271
        %v284 = vmul.f32 %v283, %v282
        %v285 = vmul.f32 0.5, %v284
        %v286 = vsub.f32 1.5, %v285
        %v287 = vmul.f32 %v282, %v286
        %vm288 = vweird.f32 %v271
        %vm289 = vweird.f32 %v282
        %vm290 = vmor %vm288, %vm289
        %v291 = vsel %vm290, %v282, %v287
        %v292 = vmul.f32 %v247, %v281
        %v293 = vmul.f32 %v248, %v281
        %v294 = vmul.f32 %v249, %v291
        %v295 = vmul.f32 %v250, %v291
        %v296 = vld [vmem:[#allocation5] sm:$0x3]
        %v298 = vperm.slane %v296, 0
        %v299 = vperm.slane %v296, 1
        %v302 = vmul.f32 %v292, %v298
        %v303 = vmul.f32 %v293, %v299
        %v304 = vmul.f32 %v294, %v298
        %v305 = vmul.f32 %v295, %v299
        %v306 = vpack.c.bf16 %v304, %v302
        %v307 = vpack.c.bf16 %v305, %v303
        %v308 = vld [vmem:[%s219] sm:$0xff]
        %v309 = vld [vmem:[%s219 + $0x8] sm:$0xff]
        %v310 = vld [vmem:[%s219 + $0x10] sm:$0xff]
        %v311 = vld [vmem:[%s219 + $0x18] sm:$0xff]
        %v312 = vld [vmem:[%s219 + $0x20] sm:$0xff]
        %v313 = vld [vmem:[%s219 + $0x28] sm:$0xff]
        %v314 = vld [vmem:[%s219 + $0x30] sm:$0xff]
        %v315 = vld [vmem:[%s219 + $0x38] sm:$0xff]
        %v316 = vld [vmem:[%s219 + $0x40] sm:$0xff]
        %v317 = vld [vmem:[%s219 + $0x48] sm:$0xff]
        %v318 = vld [vmem:[%s219 + $0x50] sm:$0xff]
        %v319 = vld [vmem:[%s219 + $0x58] sm:$0xff]
        %v320 = vld [vmem:[%s219 + $0x60] sm:$0xff]
        %v321 = vld [vmem:[%s219 + $0x68] sm:$0xff]
        %v322 = vld [vmem:[%s219 + $0x70] sm:$0xff]
        %v323 = vld [vmem:[%s219 + $0x78] sm:$0xff]
        %v324 = vld [vmem:[%s219 + $0x80] sm:$0xff]
        %v325 = vld [vmem:[%s219 + $0x88] sm:$0xff]
        %v326 = vld [vmem:[%s219 + $0x90] sm:$0xff]
        %v327 = vld [vmem:[%s219 + $0x98] sm:$0xff]
        %v328 = vld [vmem:[%s219 + $0xa0] sm:$0xff]
        %v329 = vld [vmem:[%s219 + $0xa8] sm:$0xff]
        %v330 = vld [vmem:[%s219 + $0xb0] sm:$0xff]
        %v331 = vld [vmem:[%s219 + $0xb8] sm:$0xff]
        %v332 = vld [vmem:[%s219 + $0xc0] sm:$0xff]
        %v333 = vld [vmem:[%s219 + $0xc8] sm:$0xff]
        %v334 = vld [vmem:[%s219 + $0xd0] sm:$0xff]
        %v335 = vld [vmem:[%s219 + $0xd8] sm:$0xff]
        %v336 = vld [vmem:[%s219 + $0xe0] sm:$0xff]
        %v337 = vld [vmem:[%s219 + $0xe8] sm:$0xff]
        %v338 = vld [vmem:[%s219 + $0xf0] sm:$0xff]
        %v339 = vld [vmem:[%s219 + $0xf8] sm:$0xff]
        %v372 = vunpack.c.l.b16 %v308
        %v373 = vunpack.c.h.b16 %v308
        %v374 = vunpack.c.l.b16 %v309
        %v375 = vunpack.c.h.b16 %v309
        %v376 = vunpack.c.l.b16 %v310
        %v377 = vunpack.c.h.b16 %v310
        %v378 = vunpack.c.l.b16 %v311
        %v379 = vunpack.c.h.b16 %v311
        %v380 = vunpack.c.l.b16 %v312
        %v381 = vunpack.c.h.b16 %v312
        %v382 = vunpack.c.l.b16 %v313
        %v383 = vunpack.c.h.b16 %v313
        %v384 = vunpack.c.l.b16 %v314
        %v385 = vunpack.c.h.b16 %v314
        %v386 = vunpack.c.l.b16 %v315
        %v387 = vunpack.c.h.b16 %v315
        %v388 = vunpack.c.l.b16 %v316
        %v389 = vunpack.c.h.b16 %v316
        %v390 = vunpack.c.l.b16 %v317
        %v391 = vunpack.c.h.b16 %v317
        %v392 = vunpack.c.l.b16 %v318
        %v393 = vunpack.c.h.b16 %v318
        %v394 = vunpack.c.l.b16 %v319
        %v395 = vunpack.c.h.b16 %v319
        %v396 = vunpack.c.l.b16 %v320
        %v397 = vunpack.c.h.b16 %v320
        %v398 = vunpack.c.l.b16 %v321
        %v399 = vunpack.c.h.b16 %v321
        %v400 = vunpack.c.l.b16 %v322
        %v401 = vunpack.c.h.b16 %v322
        %v402 = vunpack.c.l.b16 %v323
        %v403 = vunpack.c.h.b16 %v323
        %v404 = vunpack.c.l.b16 %v324
        %v405 = vunpack.c.h.b16 %v324
        %v406 = vunpack.c.l.b16 %v325
        %v407 = vunpack.c.h.b16 %v325
        %v408 = vunpack.c.l.b16 %v326
        %v409 = vunpack.c.h.b16 %v326
        %v410 = vunpack.c.l.b16 %v327
        %v411 = vunpack.c.h.b16 %v327
        %v412 = vunpack.c.l.b16 %v328
        %v413 = vunpack.c.h.b16 %v328
        %v414 = vunpack.c.l.b16 %v329
        %v415 = vunpack.c.h.b16 %v329
        %v416 = vunpack.c.l.b16 %v330
        %v417 = vunpack.c.h.b16 %v330
        %v418 = vunpack.c.l.b16 %v331
        %v419 = vunpack.c.h.b16 %v331
        %v420 = vunpack.c.l.b16 %v332
        %v421 = vunpack.c.h.b16 %v332
        %v422 = vunpack.c.l.b16 %v333
        %v423 = vunpack.c.h.b16 %v333
        %v424 = vunpack.c.l.b16 %v334
        %v425 = vunpack.c.h.b16 %v334
        %v426 = vunpack.c.l.b16 %v335
        %v427 = vunpack.c.h.b16 %v335
        %v428 = vunpack.c.l.b16 %v336
        %v429 = vunpack.c.h.b16 %v336
        %v430 = vunpack.c.l.b16 %v337
        %v431 = vunpack.c.h.b16 %v337
        %v432 = vunpack.c.l.b16 %v338
        %v433 = vunpack.c.h.b16 %v338
        %v434 = vunpack.c.l.b16 %v339
        %v435 = vunpack.c.h.b16 %v339
        %v436 = vpack.c.b16 %v374, %v372
        %v437 = vpack.c.b16 %v375, %v373
        %v438 = vpack.c.b16 %v378, %v376
        %v439 = vpack.c.b16 %v379, %v377
        %v440 = vpack.c.b16 %v382, %v380
        %v441 = vpack.c.b16 %v383, %v381
        %v442 = vpack.c.b16 %v386, %v384
        %v443 = vpack.c.b16 %v387, %v385
        %v444 = vpack.c.b16 %v390, %v388
        %v445 = vpack.c.b16 %v391, %v389
        %v446 = vpack.c.b16 %v394, %v392
        %v447 = vpack.c.b16 %v395, %v393
        %v448 = vpack.c.b16 %v398, %v396
        %v449 = vpack.c.b16 %v399, %v397
        %v450 = vpack.c.b16 %v402, %v400
        %v451 = vpack.c.b16 %v403, %v401
        %v452 = vpack.c.b16 %v406, %v404
        %v453 = vpack.c.b16 %v407, %v405
        %v454 = vpack.c.b16 %v410, %v408
        %v455 = vpack.c.b16 %v411, %v409
        %v456 = vpack.c.b16 %v414, %v412
        %v457 = vpack.c.b16 %v415, %v413
        %v458 = vpack.c.b16 %v418, %v416
        %v459 = vpack.c.b16 %v419, %v417
        %v460 = vpack.c.b16 %v422, %v420
        %v461 = vpack.c.b16 %v423, %v421
        %v462 = vpack.c.b16 %v426, %v424
        %v463 = vpack.c.b16 %v427, %v425
        %v464 = vpack.c.b16 %v430, %v428
        %v465 = vpack.c.b16 %v431, %v429
        %v466 = vpack.c.b16 %v434, %v432
        %v467 = vpack.c.b16 %v435, %v433
        %500 = vmatpush.bf16.msra.mxu0 %v450
        %501 = vmatpush.bf16.msra.mxu0 %v448
        %502 = vmatpush.bf16.msra.mxu0 %v446
        %503 = vmatpush.bf16.msra.mxu0 %v444
        %504 = vmatpush.bf16.msra.mxu0 %v442
        %505 = vmatpush.bf16.msra.mxu0 %v440
        %506 = vmatpush.bf16.msra.mxu0 %v438
        %507 = vmatpush.bf16.msra.mxu0 %v436
        %508 = vmatmul.bf16.gmra.mxu0 %v306
        %v509 = vpop.f32.mrf.mxu0
        %v510 = vadd.f32 0.0, %v509
        %v511 = vpop.f32.mrf.mxu0
        %v512 = vadd.f32 0.0, %v511
        %513 = vdwg.mxu0
        %514 = vmatpush.bf16.msra.mxu0 %v466
        %515 = vmatpush.bf16.msra.mxu0 %v464
        %516 = vmatpush.bf16.msra.mxu0 %v462
        %517 = vmatpush.bf16.msra.mxu0 %v460
        %518 = vmatpush.bf16.msra.mxu0 %v458
        %519 = vmatpush.bf16.msra.mxu0 %v456
        %520 = vmatpush.bf16.msra.mxu0 %v454
        %521 = vmatpush.bf16.msra.mxu0 %v452
        %522 = vmatmul.bf16.gmra.mxu0 %v307
        %v523 = vpop.f32.mrf.mxu0
        %v524 = vadd.f32 %v510, %v523
        %v525 = vpop.f32.mrf.mxu0
        %v526 = vadd.f32 %v512, %v525
        %527 = vdwg.mxu0
        %528 = vmatpush.bf16.msra.mxu0 %v451
        %529 = vmatpush.bf16.msra.mxu0 %v449
        %530 = vmatpush.bf16.msra.mxu0 %v447
        %531 = vmatpush.bf16.msra.mxu0 %v445
        %532 = vmatpush.bf16.msra.mxu0 %v443
        %533 = vmatpush.bf16.msra.mxu0 %v441
        %534 = vmatpush.bf16.msra.mxu0 %v439
        %535 = vmatpush.bf16.msra.mxu0 %v437
        %536 = vmatmul.bf16.gmra.mxu0 %v306
        %v537 = vpop.f32.mrf.mxu0
        %v538 = vadd.f32 0.0, %v537
        %v539 = vpop.f32.mrf.mxu0
        %v540 = vadd.f32 0.0, %v539
        %541 = vdwg.mxu0
        %542 = vmatpush.bf16.msra.mxu0 %v467
        %543 = vmatpush.bf16.msra.mxu0 %v465
        %544 = vmatpush.bf16.msra.mxu0 %v463
        %545 = vmatpush.bf16.msra.mxu0 %v461
        %546 = vmatpush.bf16.msra.mxu0 %v459
        %547 = vmatpush.bf16.msra.mxu0 %v457
        %548 = vmatpush.bf16.msra.mxu0 %v455
        %549 = vmatpush.bf16.msra.mxu0 %v453
        %550 = vmatmul.bf16.gmra.mxu0 %v307
        %v551 = vpop.f32.mrf.mxu0
        %v552 = vadd.f32 %v538, %v551
        %v553 = vpop.f32.mrf.mxu0
        %v554 = vadd.f32 %v540, %v553
        %555 = vdwg.mxu0
        %556 = vst [vmem:[%s242] sm:$0xff] %v524
        %557 = vst [vmem:[%s242 + $0x8] sm:$0xff] %v552
        %558 = vst [vmem:[%s242 + $0x10] sm:$0xff] %v526
        %559 = vst [vmem:[%s242 + $0x18] sm:$0xff] %v554
        %s560 = sand.u32 %s114, 1
        %s561 = scalar_lea.sflag [#allocation4], %s560
        %s562 = sand.u32 %s114, 1
        %s563 = smul.addr %s562, 32
        %s564 = scalar_lea.vmem [#allocation8], %s563
        // Predicated region
        $region45: #{tpu_custom_call.1} parent=31 // pred_check
          %p565 = pneg %p124
        $region46: #{tpu_custom_call.1} parent=31 // pred_check_branch
          %567 = sbr.rel (%p565) target = $region48
        $region47: #{tpu_custom_call.1} parent=31 // pred_region
          %s568 = smul.u32 2, %s23
          %s569 = smul.u32 2, %s24
          %571 = vsyncadd %s561, 0
          %s572 = smul.addr %s568, 4
          %s573 = sadd.s32 %s569, %s572
          %s574 = smul.addr %s573, 8
          %s575 = scalar_lea.hbm %s3, %s574
          %s576 = sshll.u32 %s564, 4
          %s577 = int_to_ptr.vmem [resolvable:$true] %s576
          %s578 = sshll.u32 %s575, 4
          %s579 = int_to_ptr.hbm [resolvable:$true] %s578
          %584 = dma.vmem_to_hbm [thread:$0]  %s577, 512, %s579, %s561, 256, 512, 16
        $region48: #{tpu_custom_call.1} parent=31 // pred_fallthru
          _
      $region32: #{tpu_custom_call.1} parent=5 // pred_fallthru
        _
      %p585 = scmp.le.s32.totalorder 2, %s14
      // Predicated region
      $region49: #{tpu_custom_call.1} parent=5 // pred_check
        %p586 = pneg %p585
      $region50: #{tpu_custom_call.1} parent=5 // pred_check_branch
        %588 = sbr.rel (%p586) target = $region52
      $region51: #{tpu_custom_call.1} parent=5 // pred_region
        %s589 = ssub.s32 %s14, 2
        // Predicated region
        $region53: #{tpu_custom_call.1} parent=51 // pred_check
          %p590 = pneg %p130
        $region54: #{tpu_custom_call.1} parent=51 // pred_check_branch
          %592 = sbr.rel (%p590) target = $region56
        $region55: #{tpu_custom_call.1} parent=51 // pred_region
          %s593 = sand.u32 %s115, 1
          %s594 = scalar_lea.sflag [#allocation4], %s593
          %s595 = sand.u32 %s115, 1
          %s596 = smul.addr %s595, 32
          %s597 = scalar_lea.vmem [#allocation8], %s596
          %599 = dma.done %s594, 512
        $region56: #{tpu_custom_call.1} parent=51 // pred_fallthru
          _
      $region52: #{tpu_custom_call.1} parent=5 // pred_fallthru
        _
    $region6: #{tpu_custom_call.1} parent=1 // loop_footer
      %s18 = sadd.s32 1, %s14
    $region7: #{tpu_custom_call.1} parent=1 // loop_footer_branch
      %13 = sbr.rel target = $region3
    $region8: #{tpu_custom_call.1} parent=1 // loop_exit
      _
    %600 = vsyncpa [#allocation3], 1
    %s601 = scalar_lea.sflag [#allocation3], 1
    %602 = vsyncpa %s601, 1
    %603 = vsyncpa [#allocation6], 1
    %604 = vsyncpa [#allocation4], 1
    %s605 = scalar_lea.sflag [#allocation4], 1
    %606 = vsyncpa %s605, 1

</llo_original>
